<compile_context>
chip_gen: v6e
topology: v6e:2x2x1
jax: 0.10.0
libtpu: 0.0.40
codegen_flags: <defaults>
</compile_context>

<pallas_src>
import functools

import jax
import jax.numpy as jnp
from jax import lax
from jax.experimental import pallas as pl
from jax.experimental.pallas import tpu as pltpu

LARGE_NUMBER = 1.0e9


# ----------------------------------------------------------------------------
# Pass 1: row L2-normalize and scale by 1/sqrt(tau)
# ----------------------------------------------------------------------------
def _normalize_kernel(z_ref, o_ref, *, inv_sqrt_tau):
    z = z_ref[...].astype(jnp.float32)
    ssq = jnp.sum(z * z, axis=1, keepdims=True)
    inv = lax.rsqrt(jnp.maximum(ssq, 1e-24))  # F.normalize clamps ||z|| at 1e-12
    o_ref[...] = z * (inv * inv_sqrt_tau)


# ----------------------------------------------------------------------------
# Pass 2: flash-style tiled similarity + online log-softmax + positive gather
# ----------------------------------------------------------------------------
def _ntxent_tile_kernel(*refs, block_m, block_k, num_pos, scale):
    num_in = 2 + num_pos
    q_ref = refs[0]                      # (block_m, D) normalized rows
    k_ref = refs[1]                      # (block_k, D) normalized rows (logit cols)
    pos_refs = refs[2:num_in]            # (m-1) block-shifted copies of z
    out_ref = refs[num_in]               # (1, 1, 1) per-row-tile partial loss
    s_ref = refs[num_in + 1]             # (block_m, block_k) f32 scores scratch
    m_ref = refs[num_in + 2]             # (block_m, 1) running row max
    l_ref = refs[num_in + 3]             # (block_m, 1) running sum-exp

    ri = pl.program_id(0)
    ki = pl.program_id(1)
    nk = pl.num_programs(1)

    @pl.when(ki == 0)
    def _init():
        m_ref[...] = jnp.full_like(m_ref, -jnp.inf)
        l_ref[...] = jnp.zeros_like(l_ref)

    q = q_ref[...]
    k = k_ref[...]
    # NT contraction feeds the MXU directly (no transposed copy of k).
    s_ref[...] = lax.dot_general(
        q, k,
        dimension_numbers=(((1,), (1,)), ((), ())),
        preferred_element_type=jnp.float32,
    )

    # Mask the self-similarity diagonal only on tiles that contain it.
    row0 = ri * block_m
    col0 = ki * block_k

    @pl.when(jnp.logical_and(row0 < col0 + block_k, col0 < row0 + block_m))
    def _mask_diag():
        rg = row0 + lax.broadcasted_iota(jnp.int32, (block_m, block_k), 0)
        cg = col0 + lax.broadcasted_iota(jnp.int32, (block_m, block_k), 1)
        s_ref[...] = jnp.where(rg == cg, -LARGE_NUMBER, s_ref[...])

    # Online softmax statistics update (all f32).
    s = s_ref[...]
    m_prev = m_ref[...]
    m_new = jnp.maximum(m_prev, jnp.max(s, axis=1, keepdims=True))
    alpha = jnp.exp(m_prev - m_new)
    l_ref[...] = alpha * l_ref[...] + jnp.sum(jnp.exp(s - m_new), axis=1,
                                              keepdims=True)
    m_ref[...] = m_new

    @pl.when(ki == nk - 1)
    def _finalize():
        lse = m_ref[...] + jnp.log(l_ref[...])               # (block_m, 1)
        pos = jnp.zeros((block_m, 1), jnp.float32)
        for p_ref in pos_refs:                                # O(block_m * D) each
            pos = pos + jnp.sum(q * p_ref[...], axis=1, keepdims=True)
        contrib = jnp.sum(pos - jnp.float32(num_pos) * lse)
        out_ref[0, 0, 0] = contrib * scale


# ----------------------------------------------------------------------------
# Wrapper
# ----------------------------------------------------------------------------
def _pick_tile(dim, candidates):
    for c in candidates:
        if dim % c == 0:
            return c
    return dim


def _make_row_map():
    return lambda ri, ki: (ri, 0)


def _make_col_map():
    return lambda ri, ki: (ki, 0)


def _make_shift_map(shift_blocks, nblocks):
    def idx(ri, ki):
        return ((ri + shift_blocks) % nblocks, 0)
    return idx


def ntxent_loss(z, tau: float = 1.0, multiplier: int = 2, norm: float = 1.0,
                block_m: int | None = None, block_k: int | None = None):
    """Pallas implementation of NTXent.forward (non-distributed path).

    Returns (loss, 0) matching the PyTorch module.
    """
    n, d = z.shape
    m = int(multiplier)
    if m < 2:
        raise ValueError("multiplier must be >= 2")
    if n % m:
        raise ValueError("n must be divisible by multiplier")
    group = n // m
    if group % 8:
        raise ValueError("this kernel requires (n // multiplier) % 8 == 0")

    # Tile sizes: prefer MXU-friendly 256/512-multiples (v6e/v7x), fall back to
    # smaller multiples of 8 for small inputs.  Working set stays a few MiB.
    if block_m is None:
        block_m = _pick_tile(group, (256, 128, 64, 32, 16, 8))
    if block_k is None:
        block_k = _pick_tile(n, (512, 256, 128, 64, 32, 16, 8))
    assert group % block_m == 0 and block_m % 8 == 0
    assert n % block_k == 0 and (block_k % 8 == 0 or block_k == n)

    num_row = n // block_m
    num_col = n // block_k
    num_pos = m - 1
    inv_sqrt_tau = float(1.0 / (float(tau) ** 0.5))
    scale = -1.0 / (float(n) * float(num_pos) * float(norm))

    # ---- Pass 1: normalize once (not re-done per grid step of pass 2) -------
    tz = _pick_tile(n, (512, 256, 128, 64, 32, 16, 8))
    zn = pl.pallas_call(
        functools.partial(_normalize_kernel, inv_sqrt_tau=inv_sqrt_tau),
        out_shape=jax.ShapeDtypeStruct((n, d), jnp.float32),
        grid_spec=pltpu.PrefetchScalarGridSpec(
            num_scalar_prefetch=0,
            grid=(n // tz,),
            in_specs=[pl.BlockSpec((tz, d), lambda i: (i, 0))],
            out_specs=pl.BlockSpec((tz, d), lambda i: (i, 0)),
        ),
        compiler_params=pltpu.CompilerParams(
            dimension_semantics=("parallel",),
            vmem_limit_bytes=32 * 1024 * 1024,
        ),
    )(z)

    # ---- Pass 2: flash-style tiled loss --------------------------------------
    in_specs = [
        pl.BlockSpec((block_m, d), _make_row_map()),   # query rows (resident over ki)
        pl.BlockSpec((block_k, d), _make_col_map()),   # rows acting as logit columns
    ]
    for k in range(1, m):
        shift_blocks = (k * group) // block_m          # exact: block_m | group
        in_specs.append(
            pl.BlockSpec((block_m, d), _make_shift_map(shift_blocks, num_row)))

    kernel = functools.partial(
        _ntxent_tile_kernel,
        block_m=block_m, block_k=block_k, num_pos=num_pos, scale=scale)

    partials = pl.pallas_call(
        kernel,
        out_shape=jax.ShapeDtypeStruct((num_row, 1, 1), jnp.float32),
        grid_spec=pltpu.PrefetchScalarGridSpec(
            num_scalar_prefetch=0,
            grid=(num_row, num_col),                   # reduction (softmax) axis last
            in_specs=in_specs,
            out_specs=pl.BlockSpec((1, 1, 1), lambda ri, ki: (ri, 0, 0)),
            scratch_shapes=[
                pltpu.VMEM((block_m, block_k), jnp.float32),   # scores tile
                pltpu.VMEM((block_m, 1), jnp.float32),         # running max
                pltpu.VMEM((block_m, 1), jnp.float32),         # running sum-exp
            ],
        ),
        compiler_params=pltpu.CompilerParams(
            dimension_semantics=("parallel", "arbitrary"),
            vmem_limit_bytes=32 * 1024 * 1024,
        ),
    )(zn, zn, *([zn] * num_pos))

    loss = jnp.sum(partials)   # tiny (num_row-element) reduce of pre-scaled partials
    # TODO(synk): distributed=True branch (torch.distributed all-gather reorder)
    # has no single-device Pallas equivalent; only the local path is implemented.
    return loss, 0


# ----------------------------------------------------------------------------
# Plain-JAX reference for the correctness check
# ----------------------------------------------------------------------------
def _ntxent_reference(z, tau=1.0, multiplier=2, norm=1.0):
    n = z.shape[0]
    zn = z / jnp.linalg.norm(z, axis=1, keepdims=True) / jnp.sqrt(jnp.float32(tau))
    logits = zn @ zn.T
    logits = logits.at[jnp.arange(n), jnp.arange(n)].set(-LARGE_NUMBER)
    logprob = jax.nn.log_softmax(logits, axis=1)
    m = multiplier
    labels = (jnp.repeat(jnp.arange(n), m) + jnp.tile(jnp.arange(m) * n // m, n)) % n
    labels = labels.reshape(n, m)[:, 1:].reshape(-1)
    rows = jnp.repeat(jnp.arange(n), m - 1)
    return -logprob[rows, labels].sum() / n / (m - 1) / norm


if __name__ == "__main__":
    key = jax.random.PRNGKey(0)
    # SimCLR-style: 64 images x 2 augmented views -> n = 128 rows, 64-d projection.
    n, d = 128, 64
    z = jax.random.normal(key, (n, d), dtype=jnp.float32)

    tau, mult = 0.5, 2
    # Explicit small tiles so this small demo still exercises the full
    # (row-tile x column-tile) online-softmax grid; defaults pick larger tiles.
    loss, aux = ntxent_loss(z, tau=tau, multiplier=mult, block_m=32, block_k=64)
    loss = jax.block_until_ready(loss)

    ref = _ntxent_reference(z, tau=tau, multiplier=mult)
    assert jnp.allclose(loss, ref, rtol=1e-4, atol=1e-4), (loss, ref)

    print("KERNEL_OK")
</pallas_src>

<mosaic_0001>
module attributes {stable_mosaic.version = 11 : i64} {
  func.func @_normalize_kernel(%arg0: i32, %arg1: memref<128x64xf32, #tpu.memory_space<vmem>>, %arg2: memref<128x64xf32, #tpu.memory_space<vmem>>) attributes {dimension_semantics = [#tpu.dimension_semantics<parallel>], iteration_bounds = array<i64: 1>, scalar_prefetch = 0 : i64, scratch_operands = 0 : i64, tpu.core_type = #tpu.core_type<tc>, window_params = [{transform_indices = @transform_0, window_bounds = array<i64: 128, 64>}, {transform_indices = @transform_1, window_bounds = array<i64: 128, 64>}]} {
    %c0 = arith.constant 0 : index
    %c0_0 = arith.constant 0 : index
    %0 = vector.load %arg1[%c0, %c0_0] : memref<128x64xf32, #tpu.memory_space<vmem>>, vector<128x64xf32>
    %1 = arith.mulf %0, %0 : vector<128x64xf32>
    %cst = arith.constant dense<0.000000e+00> : vector<128xf32>
    %2 = vector.multi_reduction <add>, %1, %cst [1] : vector<128x64xf32> to vector<128xf32>
    %3 = vector.shape_cast %2 : vector<128xf32> to vector<128x1xf32>
    %cst_1 = arith.constant 1.000000e-24 : f32
    %4 = vector.broadcast %cst_1 : f32 to vector<128x1xf32>
    %5 = arith.maximumf %3, %4 : vector<128x1xf32>
    %6 = math.rsqrt %5 : vector<128x1xf32>
    %cst_2 = arith.constant 1.41421354 : f32
    %7 = vector.broadcast %cst_2 : f32 to vector<128x1xf32>
    %8 = arith.mulf %6, %7 : vector<128x1xf32>
    %9 = vector.broadcast %8 : vector<128x1xf32> to vector<128x64xf32>
    %10 = arith.mulf %0, %9 : vector<128x64xf32>
    %c0_3 = arith.constant 0 : index
    %c0_4 = arith.constant 0 : index
    %11 = vector.load %arg2[%c0_3, %c0_4] : memref<128x64xf32, #tpu.memory_space<vmem>>, vector<128x64xf32>
    tpu.vector_store %arg2[%c0_3, %c0_4], %10 {strides = array<i32>} : memref<128x64xf32, #tpu.memory_space<vmem>>, vector<128x64xf32>,
    return
  }
  func.func @transform_0(%arg0: i32) -> (i32, i32) {
    %c0_i32 = arith.constant 0 : i32
    %c0_i32_0 = arith.constant 0 : i32
    return %arg0, %c0_i32 : i32, i32
  }
  func.func @transform_1(%arg0: i32) -> (i32, i32) {
    %c0_i32 = arith.constant 0 : i32
    %c0_i32_0 = arith.constant 0 : i32
    return %arg0, %c0_i32 : i32, i32
  }
}

</mosaic_0001>

<llo_original>
// kernel: tpu_custom_call.1
$region0: #{tpu_custom_call.1}
  #allocation0 [shape = 'u32[]', space=smem, size = 0x4, offset = 0x4, fixed_abs, tag = 'smem constant byte address 0x4 - core index']
  #allocation1 [shape = 'u32[144,128]{1,0:T(1,128)}', space=vmem, size = 0x12000, scoped, tag = 'internal scratch']
  %s0 = inlined_call_operand.vmem [shape: f32[128,64], index: 0, kind: input, shape index: {}]
  %s1 = inlined_call_operand.vmem [shape: f32[128,64], index: 1, kind: output, shape index: {}]
  %s2 = sld [smem:[#allocation0]]
  $region14: #{tpu_custom_call.1} parent=0
    _
  %s4 = ssub.s32 1, %s2
  %s5 = scalar_select 0, %s4, %s2
  // Predicated region
  $region2: #{tpu_custom_call.1} parent=0 // pred_check
    _
  $region3: #{tpu_custom_call.1} parent=0 // pred_check_branch
    %7 = sbr.rel (0) target = $region5
  $region4: #{tpu_custom_call.1} parent=0 // pred_region
    _
  $region5: #{tpu_custom_call.1} parent=0 // pred_fallthru
    _
  %v8 = vld [vmem:[%s0] sm:$0xff]
  %v9 = vld [vmem:[%s0 + $0x8] sm:$0xff]
  %v10 = vld [vmem:[%s0 + $0x10] sm:$0xff]
  %v11 = vld [vmem:[%s0 + $0x18] sm:$0xff]
  %v12 = vld [vmem:[%s0 + $0x20] sm:$0xff]
  %v13 = vld [vmem:[%s0 + $0x28] sm:$0xff]
  %v14 = vld [vmem:[%s0 + $0x30] sm:$0xff]
  %v15 = vld [vmem:[%s0 + $0x38] sm:$0xff]
  %v16 = vld [vmem:[%s0 + $0x40] sm:$0xff]
  %v17 = vld [vmem:[%s0 + $0x48] sm:$0xff]
  %v18 = vld [vmem:[%s0 + $0x50] sm:$0xff]
  %v19 = vld [vmem:[%s0 + $0x58] sm:$0xff]
  %v20 = vld [vmem:[%s0 + $0x60] sm:$0xff]
  %v21 = vld [vmem:[%s0 + $0x68] sm:$0xff]
  %v22 = vld [vmem:[%s0 + $0x70] sm:$0xff]
  %v23 = vld [vmem:[%s0 + $0x78] sm:$0xff]
  %v24 = vmul.f32 %v8, %v8
  %v25 = vmul.f32 %v9, %v9
  %v26 = vmul.f32 %v10, %v10
  %v27 = vmul.f32 %v11, %v11
  %v28 = vmul.f32 %v12, %v12
  %v29 = vmul.f32 %v13, %v13
  %v30 = vmul.f32 %v14, %v14
  %v31 = vmul.f32 %v15, %v15
  %v32 = vmul.f32 %v16, %v16
  %v33 = vmul.f32 %v17, %v17
  %v34 = vmul.f32 %v18, %v18
  %v35 = vmul.f32 %v19, %v19
  %v36 = vmul.f32 %v20, %v20
  %v37 = vmul.f32 %v21, %v21
  %v38 = vmul.f32 %v22, %v22
  %v39 = vmul.f32 %v23, %v23
  %vm40 = vcmask 523264
  %v41 = vsel %vm40, %v24, 0.0
  %42 = vadd.xlane.f32.xlu0 %v41
  %v43 = vpop.xlane.xlu0 %42
  %v44 = vsel %vm40, %v25, 0.0
  %45 = vadd.xlane.f32.xlu0 %v44
  %v46 = vpop.xlane.xlu0 %45
  %v47 = vsel %vm40, %v26, 0.0
  %48 = vadd.xlane.f32.xlu0 %v47
  %v49 = vpop.xlane.xlu0 %48
  %v50 = vsel %vm40, %v27, 0.0
  %51 = vadd.xlane.f32.xlu0 %v50
  %v52 = vpop.xlane.xlu0 %51
  %v53 = vsel %vm40, %v28, 0.0
  %54 = vadd.xlane.f32.xlu0 %v53
  %v55 = vpop.xlane.xlu0 %54
  %v56 = vsel %vm40, %v29, 0.0
  %57 = vadd.xlane.f32.xlu0 %v56
  %v58 = vpop.xlane.xlu0 %57
  %v59 = vsel %vm40, %v30, 0.0
  %60 = vadd.xlane.f32.xlu0 %v59
  %v61 = vpop.xlane.xlu0 %60
  %v62 = vsel %vm40, %v31, 0.0
  %63 = vadd.xlane.f32.xlu0 %v62
  %v64 = vpop.xlane.xlu0 %63
  %v65 = vsel %vm40, %v32, 0.0
  %66 = vadd.xlane.f32.xlu0 %v65
  %v67 = vpop.xlane.xlu0 %66
  %v68 = vsel %vm40, %v33, 0.0
  %69 = vadd.xlane.f32.xlu0 %v68
  %v70 = vpop.xlane.xlu0 %69
  %v71 = vsel %vm40, %v34, 0.0
  %72 = vadd.xlane.f32.xlu0 %v71
  %v73 = vpop.xlane.xlu0 %72
  %v74 = vsel %vm40, %v35, 0.0
  %75 = vadd.xlane.f32.xlu0 %v74
  %v76 = vpop.xlane.xlu0 %75
  %v77 = vsel %vm40, %v36, 0.0
  %78 = vadd.xlane.f32.xlu0 %v77
  %v79 = vpop.xlane.xlu0 %78
  %v80 = vsel %vm40, %v37, 0.0
  %81 = vadd.xlane.f32.xlu0 %v80
  %v82 = vpop.xlane.xlu0 %81
  %v83 = vsel %vm40, %v38, 0.0
  %84 = vadd.xlane.f32.xlu0 %v83
  %v85 = vpop.xlane.xlu0 %84
  %v86 = vsel %vm40, %v39, 0.0
  %87 = vadd.xlane.f32.xlu0 %v86
  %v88 = vpop.xlane.xlu0 %87
  %v89 = vmax.f32 %v43, 1e-24
  %v90 = vmax.f32 %v46, 1e-24
  %v91 = vmax.f32 %v49, 1e-24
  %v92 = vmax.f32 %v52, 1e-24
  %v93 = vmax.f32 %v55, 1e-24
  %v94 = vmax.f32 %v58, 1e-24
  %v95 = vmax.f32 %v61, 1e-24
  %v96 = vmax.f32 %v64, 1e-24
  %v97 = vmax.f32 %v67, 1e-24
  %v98 = vmax.f32 %v70, 1e-24
  %v99 = vmax.f32 %v73, 1e-24
  %v100 = vmax.f32 %v76, 1e-24
  %v101 = vmax.f32 %v79, 1e-24
  %v102 = vmax.f32 %v82, 1e-24
  %v103 = vmax.f32 %v85, 1e-24
  %v104 = vmax.f32 %v88, 1e-24
  %v105 = vrsqrt.pop %v89
  %v106 = vrsqrt.pop %v90
  %v107 = vrsqrt.pop %v91
  %v108 = vrsqrt.pop %v92
  %v109 = vrsqrt.pop %v93
  %v110 = vrsqrt.pop %v94
  %v111 = vrsqrt.pop %v95
  %v112 = vrsqrt.pop %v96
  %v113 = vrsqrt.pop %v97
  %v114 = vrsqrt.pop %v98
  %v115 = vrsqrt.pop %v99
  %v116 = vrsqrt.pop %v100
  %v117 = vrsqrt.pop %v101
  %v118 = vrsqrt.pop %v102
  %v119 = vrsqrt.pop %v103
  %v120 = vrsqrt.pop %v104
  %v121 = vmul.f32 %v105, 1.4142135
  %v122 = vmul.f32 %v106, 1.4142135
  %v123 = vmul.f32 %v107, 1.4142135
  %v124 = vmul.f32 %v108, 1.4142135
  %v125 = vmul.f32 %v109, 1.4142135
  %v126 = vmul.f32 %v110, 1.4142135
  %v127 = vmul.f32 %v111, 1.4142135
  %v128 = vmul.f32 %v112, 1.4142135
  %v129 = vmul.f32 %v113, 1.4142135
  %v130 = vmul.f32 %v114, 1.4142135
  %v131 = vmul.f32 %v115, 1.4142135
  %v132 = vmul.f32 %v116, 1.4142135
  %v133 = vmul.f32 %v117, 1.4142135
  %v134 = vmul.f32 %v118, 1.4142135
  %v135 = vmul.f32 %v119, 1.4142135
  %v136 = vmul.f32 %v120, 1.4142135
  %v137 = vmul.f32 %v8, %v121
  %v138 = vmul.f32 %v9, %v122
  %v139 = vmul.f32 %v10, %v123
  %v140 = vmul.f32 %v11, %v124
  %v141 = vmul.f32 %v12, %v125
  %v142 = vmul.f32 %v13, %v126
  %v143 = vmul.f32 %v14, %v127
  %v144 = vmul.f32 %v15, %v128
  %v145 = vmul.f32 %v16, %v129
  %v146 = vmul.f32 %v17, %v130
  %v147 = vmul.f32 %v18, %v131
  %v148 = vmul.f32 %v19, %v132
  %v149 = vmul.f32 %v20, %v133
  %v150 = vmul.f32 %v21, %v134
  %v151 = vmul.f32 %v22, %v135
  %v152 = vmul.f32 %v23, %v136
  %153 = vst.msk [vmem:[%s1] sm:$0xff] %vm40, %v137
  %154 = vst.msk [vmem:[%s1 + $0x8] sm:$0xff] %vm40, %v138
  %155 = vst.msk [vmem:[%s1 + $0x10] sm:$0xff] %vm40, %v139
  %156 = vst.msk [vmem:[%s1 + $0x18] sm:$0xff] %vm40, %v140
  %157 = vst.msk [vmem:[%s1 + $0x20] sm:$0xff] %vm40, %v141
  %158 = vst.msk [vmem:[%s1 + $0x28] sm:$0xff] %vm40, %v142
  %159 = vst.msk [vmem:[%s1 + $0x30] sm:$0xff] %vm40, %v143
  %160 = vst.msk [vmem:[%s1 + $0x38] sm:$0xff] %vm40, %v144
  %161 = vst.msk [vmem:[%s1 + $0x40] sm:$0xff] %vm40, %v145
  %162 = vst.msk [vmem:[%s1 + $0x48] sm:$0xff] %vm40, %v146
  %163 = vst.msk [vmem:[%s1 + $0x50] sm:$0xff] %vm40, %v147
  %164 = vst.msk [vmem:[%s1 + $0x58] sm:$0xff] %vm40, %v148
  %165 = vst.msk [vmem:[%s1 + $0x60] sm:$0xff] %vm40, %v149
  %166 = vst.msk [vmem:[%s1 + $0x68] sm:$0xff] %vm40, %v150
  %167 = vst.msk [vmem:[%s1 + $0x70] sm:$0xff] %vm40, %v151
  %168 = vst.msk [vmem:[%s1 + $0x78] sm:$0xff] %vm40, %v152
  // Predicated region
  $region6: #{tpu_custom_call.1} parent=0 // pred_check
    _
  $region7: #{tpu_custom_call.1} parent=0 // pred_check_branch
    %170 = sbr.rel (0) target = $region9
  $region8: #{tpu_custom_call.1} parent=0 // pred_region
    _
  $region9: #{tpu_custom_call.1} parent=0 // pred_fallthru
    _
  // Predicated region
  $region10: #{tpu_custom_call.1} parent=0 // pred_check
    _
  $region11: #{tpu_custom_call.1} parent=0 // pred_check_branch
    %172 = sbr.rel (0) target = $region13
  $region12: #{tpu_custom_call.1} parent=0 // pred_region
    _
  $region13: #{tpu_custom_call.1} parent=0 // pred_fallthru
    _

</llo_original>
